<compile_context>
chip_gen: v7x
topology: tpu7x:2x2x1
jax: 0.10.0
libtpu: 0.0.40
codegen_flags: <defaults>
</compile_context>

<pallas_src>
import functools

import jax
import jax.numpy as jnp
from jax import lax
from jax.experimental import pallas as pl
from jax.experimental.pallas import tpu as pltpu


def _sepconv_kernel(xm_ref, xa_ref, xb_ref, wdw_ref, wpw_ref, bias_ref, o_ref,
                    *, TH, W, C, P):
    # xm_ref:   (1, TH, W+2, C)  main rows of the zero-padded NHWC input tile
    # xa_ref:   (1, 1,  W+2, C)  halo row (padded row TH   of this tile's window)
    # xb_ref:   (1, 1,  W+2, C)  halo row (padded row TH+1 of this tile's window)
    # wdw_ref:  (3, 3, C)        depthwise 3x3 weights
    # wpw_ref:  (P, C)           pointwise 1x1 weights with BN scale folded in
    # bias_ref: (P, 1)           folded BN bias = wpw @ (beta - mean*scale), f32
    # o_ref:    (1, P, TH*W)     lane-dense output tile (channels-first, flat spatial)

    # Assemble the (TH+2, W+2, C) halo'd input window (concat along the untiled
    # leading axis, single cast to f32 afterwards) and accumulate the depthwise
    # conv in f32.
    x = jnp.concatenate([xm_ref[0], xa_ref[0], xb_ref[0]], axis=0)
    x = x.astype(jnp.float32)                       # (TH+2, W+2, C)
    wdw = wdw_ref[...].astype(jnp.float32)          # (3, 3, C)

    # Three W(sublane)-shifted views, materialized once and reused across the three
    # H offsets (leading-axis slices are cheap address offsets).
    xs = [x[:, dj:dj + W, :] for dj in range(3)]    # each (TH+2, W, C)

    acc = xs[0][0:TH] * wdw[0, 0]                   # init with first tap (no zeros+add)
    for dj in range(3):
        for di in range(3):
            if di == 0 and dj == 0:
                continue
            acc = acc + xs[dj][di:di + TH] * wdw[di, dj]

    # Pointwise 1x1 conv (BN already folded into wpw/bias).  Feed the MXU in the
    # input dtype (bf16 stays bf16), contract the channel axis of both operands
    # directly (no materialized transpose), accumulate in f32.  The result is
    # produced directly in the lane-dense (P, TH*W) orientation.
    y = acc.reshape(TH * W, C).astype(xm_ref.dtype)          # leading-dim merge
    out = lax.dot_general(                                   # (P,C) x (TH*W,C)^T
        wpw_ref[...], y,
        dimension_numbers=(((1,), (1,)), ((), ())),
        preferred_element_type=jnp.float32)                  # -> (P, TH*W) f32
    out = out + bias_ref[...]                                # (P, 1) broadcast, f32
    o_ref[0] = out.astype(o_ref.dtype)


def _pick_tile_h(H, W, C, P, itemsize):
    """Largest TH that (a) divides H, (b) keeps TH*W a multiple of 128 (lane-dense
    output blocks) unless TH == H, and (c) keeps the per-step working set within a
    conservative VMEM budget (well under v7x's 64 MiB physical / 32 MiB scoped)."""
    budget = 8 * 1024 * 1024
    for th in range(H, 0, -1):
        if H % th:
            continue
        if th != H and (th * W) % 128 != 0:
            continue
        work = (2 * (th + 2) * (W + 2) * C * itemsize   # double-buffered input rows
                + 2 * th * W * C * 4                    # f32 window copy + dw accumulator
                + 2 * th * W * P * itemsize             # double-buffered output tile
                + (9 * C + (C + 1) * P) * 4)            # weights / bias
        if work <= budget:
            return th
    return H


def separable_conv2d(x_nchw, w_dw, bn_gamma, bn_beta, bn_mean, bn_var, w_pw,
                     eps=1e-5, tile_h=None):
    """SeparableConv2d forward (eval-mode BN).

    x_nchw : (N, C, H, W)  input, PyTorch NCHW convention
    w_dw   : (C, 1, 3, 3)  depthwise conv weight (PyTorch grouped-conv layout)
    w_pw   : (P, C, 1, 1)  pointwise conv weight (PyTorch layout)
    returns: (N, P, H, W)
    """
    N, C, H, W = x_nchw.shape
    P = w_pw.shape[0]
    itemsize = jnp.dtype(x_nchw.dtype).itemsize
    TH = _pick_tile_h(H, W, C, P, itemsize) if tile_h is None else tile_h
    assert H % TH == 0, "tile_h must divide H"
    assert TH == H or (TH * W) % 128 == 0, "TH*W must be a multiple of 128 (or TH == H)"
    HW = H * W

    # Single fused wrapper pass over the activation: NCHW -> NHWC transpose + 1-px
    # zero pad.  (The output side needs no transpose at all: the kernel already
    # emits channels-first flat-spatial, and the final reshape is free.)
    x_pad = jnp.pad(jnp.transpose(x_nchw, (0, 2, 3, 1)),
                    ((0, 0), (1, 1), (1, 1), (0, 0)))            # (N, H+2, W+2, C)

    # Weight prep + BN folding (tiny, host/XLA side).
    wdw = jnp.transpose(w_dw[:, 0, :, :], (1, 2, 0))             # (3, 3, C)
    wpw2d = w_pw[:, :, 0, 0].astype(jnp.float32)                 # (P, C)
    scale = bn_gamma.astype(jnp.float32) / jnp.sqrt(bn_var.astype(jnp.float32) + eps)
    shift = bn_beta.astype(jnp.float32) - bn_mean.astype(jnp.float32) * scale
    wpw_f = (wpw2d * scale[None, :]).astype(x_nchw.dtype)        # BN scale folded in
    bias = (wpw2d @ shift).reshape(P, 1).astype(jnp.float32)     # BN shift folded in

    kernel = functools.partial(_sepconv_kernel, TH=TH, W=W, C=C, P=P)

    out_flat = pl.pallas_call(
        kernel,
        out_shape=jax.ShapeDtypeStruct((N, P, HW), x_nchw.dtype),
        grid_spec=pltpu.PrefetchScalarGridSpec(
            num_scalar_prefetch=0,
            grid=(N, H // TH),
            in_specs=[
                # main TH rows of the padded image for this (n, h) tile
                pl.BlockSpec((1, TH, W + 2, C), lambda n, h: (n, h, 0, 0)),
                # two single-row bottom-halo blocks (padded rows h*TH+TH, h*TH+TH+1);
                # the top halo is already included because the input is pre-padded.
                pl.BlockSpec((1, 1, W + 2, C), lambda n, h: (n, h * TH + TH, 0, 0)),
                pl.BlockSpec((1, 1, W + 2, C), lambda n, h: (n, h * TH + TH + 1, 0, 0)),
                pl.BlockSpec((3, 3, C), lambda n, h: (0, 0, 0)),
                pl.BlockSpec((P, C), lambda n, h: (0, 0)),
                pl.BlockSpec((P, 1), lambda n, h: (0, 0)),
            ],
            out_specs=pl.BlockSpec((1, P, TH * W), lambda n, h: (n, 0, h)),
        ),
        compiler_params=pltpu.CompilerParams(
            dimension_semantics=("parallel", "parallel"),
            vmem_limit_bytes=32 * 1024 * 1024),
    )(x_pad, x_pad, x_pad, wdw, wpw_f, bias)

    # Free reshape: row-major (N, P, H*W) has identical bytes to (N, P, H, W).
    return out_flat.reshape(N, P, H, W)


def _reference(x_nchw, w_dw, bn_gamma, bn_beta, bn_mean, bn_var, w_pw, eps=1e-5):
    """Pure-JAX reference (lax.conv) matching PyTorch semantics, for validation."""
    C = x_nchw.shape[1]
    y = jax.lax.conv_general_dilated(
        x_nchw, w_dw, window_strides=(1, 1), padding=((1, 1), (1, 1)),
        dimension_numbers=("NCHW", "OIHW", "NCHW"), feature_group_count=C)
    scale = bn_gamma / jnp.sqrt(bn_var + eps)
    y = y * scale[None, :, None, None] + (bn_beta - bn_mean * scale)[None, :, None, None]
    return jax.lax.conv_general_dilated(
        y, w_pw, window_strides=(1, 1), padding=((0, 0), (0, 0)),
        dimension_numbers=("NCHW", "OIHW", "NCHW"))


if __name__ == "__main__":
    key = jax.random.PRNGKey(0)
    N, C, H, W = 2, 4, 16, 16   # inplanes = 4
    P = 8                        # planes   = 8

    k_x, k_dw, k_pw, k_g, k_b, k_m, k_v = jax.random.split(key, 7)
    x = jax.random.normal(k_x, (N, C, H, W), dtype=jnp.float32)
    w_dw = jax.random.normal(k_dw, (C, 1, 3, 3), dtype=jnp.float32) * 0.2   # groups=C, bias=False
    w_pw = jax.random.normal(k_pw, (P, C, 1, 1), dtype=jnp.float32) * 0.2   # 1x1, bias=False
    bn_gamma = 1.0 + 0.1 * jax.random.normal(k_g, (C,), dtype=jnp.float32)
    bn_beta = 0.1 * jax.random.normal(k_b, (C,), dtype=jnp.float32)
    bn_mean = 0.1 * jax.random.normal(k_m, (C,), dtype=jnp.float32)
    bn_var = jnp.abs(jax.random.normal(k_v, (C,), dtype=jnp.float32)) + 0.5

    ref = _reference(x, w_dw, bn_gamma, bn_beta, bn_mean, bn_var, w_pw)

    # Exercise the H-tiled path (TH=8 -> grid (2, 2), halo blocks active).
    out_tiled = separable_conv2d(x, w_dw, bn_gamma, bn_beta, bn_mean, bn_var, w_pw,
                                 tile_h=8)
    out_tiled = jax.block_until_ready(out_tiled)
    assert out_tiled.shape == (N, P, H, W)
    assert jnp.allclose(out_tiled, ref, atol=1e-4, rtol=1e-4), "tiled mismatch vs reference"

    # Auto-sized tile (whole image per step at this small shape).
    out_auto = separable_conv2d(x, w_dw, bn_gamma, bn_beta, bn_mean, bn_var, w_pw)
    out_auto = jax.block_until_ready(out_auto)
    assert jnp.allclose(out_auto, ref, atol=1e-4, rtol=1e-4), "auto-tile mismatch vs reference"

    print("KERNEL_OK")
</pallas_src>

<mosaic_0001>
module attributes {stable_mosaic.version = 11 : i64} {
  func.func @_sepconv_kernel(%arg0: i32, %arg1: i32, %arg2: memref<1x8x18x4xf32, #tpu.memory_space<vmem>>, %arg3: memref<1x1x18x4xf32, #tpu.memory_space<vmem>>, %arg4: memref<1x1x18x4xf32, #tpu.memory_space<vmem>>, %arg5: memref<3x3x4xf32, #tpu.memory_space<vmem>>, %arg6: memref<8x4xf32, #tpu.memory_space<vmem>>, %arg7: memref<8x1xf32, #tpu.memory_space<vmem>>, %arg8: memref<1x8x128xf32, #tpu.memory_space<vmem>>) attributes {dimension_semantics = [#tpu.dimension_semantics<parallel>, #tpu.dimension_semantics<parallel>], iteration_bounds = array<i64: 2, 2>, scalar_prefetch = 0 : i64, scratch_operands = 0 : i64, tpu.core_type = #tpu.core_type<tc>, window_params = [{transform_indices = @transform_0, window_bounds = array<i64: 1, 8, 18, 4>}, {transform_indices = @transform_1, window_bounds = array<i64: 1, 1, 18, 4>}, {transform_indices = @transform_2, window_bounds = array<i64: 1, 1, 18, 4>}, {pipeline_mode = #tpu.pipeline_mode<synchronous>, transform_indices = @transform_3, window_bounds = array<i64: 3, 3, 4>}, {pipeline_mode = #tpu.pipeline_mode<synchronous>, transform_indices = @transform_4, window_bounds = array<i64: 8, 4>}, {pipeline_mode = #tpu.pipeline_mode<synchronous>, transform_indices = @transform_5, window_bounds = array<i64: 8, 1>}, {transform_indices = @transform_6, window_bounds = array<i64: 1, 8, 128>}]} {
    %c0 = arith.constant 0 : index
    %c0_0 = arith.constant 0 : index
    %c0_1 = arith.constant 0 : index
    %c0_2 = arith.constant 0 : index
    %0 = vector.load %arg2[%c0, %c0_0, %c0_1, %c0_2] : memref<1x8x18x4xf32, #tpu.memory_space<vmem>>, vector<1x8x18x4xf32>
    %1 = vector.shape_cast %0 : vector<1x8x18x4xf32> to vector<8x18x4xf32>
    %c0_3 = arith.constant 0 : index
    %c0_4 = arith.constant 0 : index
    %c0_5 = arith.constant 0 : index
    %c0_6 = arith.constant 0 : index
    %2 = vector.load %arg3[%c0_3, %c0_4, %c0_5, %c0_6] : memref<1x1x18x4xf32, #tpu.memory_space<vmem>>, vector<1x1x18x4xf32>
    %3 = vector.shape_cast %2 : vector<1x1x18x4xf32> to vector<1x18x4xf32>
    %c0_7 = arith.constant 0 : index
    %c0_8 = arith.constant 0 : index
    %c0_9 = arith.constant 0 : index
    %c0_10 = arith.constant 0 : index
    %4 = vector.load %arg4[%c0_7, %c0_8, %c0_9, %c0_10] : memref<1x1x18x4xf32, #tpu.memory_space<vmem>>, vector<1x1x18x4xf32>
    %5 = vector.shape_cast %4 : vector<1x1x18x4xf32> to vector<1x18x4xf32>
    %6 = tpu.concatenate %1, %3, %5 in 0 : vector<8x18x4xf32>, vector<1x18x4xf32>, vector<1x18x4xf32> -> vector<10x18x4xf32>
    %c0_11 = arith.constant 0 : index
    %c0_12 = arith.constant 0 : index
    %c0_13 = arith.constant 0 : index
    %7 = vector.load %arg5[%c0_11, %c0_12, %c0_13] : memref<3x3x4xf32, #tpu.memory_space<vmem>>, vector<3x3x4xf32>
    %8 = vector.extract_strided_slice %6 {offsets = [0, 0, 0], sizes = [10, 16, 4], strides = [1, 1, 1]} : vector<10x18x4xf32> to vector<10x16x4xf32>
    %9 = vector.extract_strided_slice %6 {offsets = [0, 1, 0], sizes = [10, 16, 4], strides = [1, 1, 1]} : vector<10x18x4xf32> to vector<10x16x4xf32>
    %10 = vector.extract_strided_slice %6 {offsets = [0, 2, 0], sizes = [10, 16, 4], strides = [1, 1, 1]} : vector<10x18x4xf32> to vector<10x16x4xf32>
    %11 = vector.extract_strided_slice %8 {offsets = [0, 0, 0], sizes = [8, 16, 4], strides = [1, 1, 1]} : vector<10x16x4xf32> to vector<8x16x4xf32>
    %12 = vector.extract_strided_slice %7 {offsets = [0, 0, 0], sizes = [1, 1, 4], strides = [1, 1, 1]} : vector<3x3x4xf32> to vector<1x1x4xf32>
    %13 = vector.shape_cast %12 : vector<1x1x4xf32> to vector<4xf32>
    %14 = vector.shape_cast %13 : vector<4xf32> to vector<1x1x4xf32>
    %15 = vector.broadcast %14 : vector<1x1x4xf32> to vector<8x16x4xf32>
    %16 = arith.mulf %11, %15 : vector<8x16x4xf32>
    %17 = vector.extract_strided_slice %8 {offsets = [1, 0, 0], sizes = [8, 16, 4], strides = [1, 1, 1]} : vector<10x16x4xf32> to vector<8x16x4xf32>
    %18 = vector.extract_strided_slice %7 {offsets = [1, 0, 0], sizes = [1, 1, 4], strides = [1, 1, 1]} : vector<3x3x4xf32> to vector<1x1x4xf32>
    %19 = vector.shape_cast %18 : vector<1x1x4xf32> to vector<4xf32>
    %20 = vector.shape_cast %19 : vector<4xf32> to vector<1x1x4xf32>
    %21 = vector.broadcast %20 : vector<1x1x4xf32> to vector<8x16x4xf32>
    %22 = arith.mulf %17, %21 : vector<8x16x4xf32>
    %23 = arith.addf %16, %22 : vector<8x16x4xf32>
    %24 = vector.extract_strided_slice %8 {offsets = [2, 0, 0], sizes = [8, 16, 4], strides = [1, 1, 1]} : vector<10x16x4xf32> to vector<8x16x4xf32>
    %25 = vector.extract_strided_slice %7 {offsets = [2, 0, 0], sizes = [1, 1, 4], strides = [1, 1, 1]} : vector<3x3x4xf32> to vector<1x1x4xf32>
    %26 = vector.shape_cast %25 : vector<1x1x4xf32> to vector<4xf32>
    %27 = vector.shape_cast %26 : vector<4xf32> to vector<1x1x4xf32>
    %28 = vector.broadcast %27 : vector<1x1x4xf32> to vector<8x16x4xf32>
    %29 = arith.mulf %24, %28 : vector<8x16x4xf32>
    %30 = arith.addf %23, %29 : vector<8x16x4xf32>
    %31 = vector.extract_strided_slice %9 {offsets = [0, 0, 0], sizes = [8, 16, 4], strides = [1, 1, 1]} : vector<10x16x4xf32> to vector<8x16x4xf32>
    %32 = vector.extract_strided_slice %7 {offsets = [0, 1, 0], sizes = [1, 1, 4], strides = [1, 1, 1]} : vector<3x3x4xf32> to vector<1x1x4xf32>
    %33 = vector.shape_cast %32 : vector<1x1x4xf32> to vector<4xf32>
    %34 = vector.shape_cast %33 : vector<4xf32> to vector<1x1x4xf32>
    %35 = vector.broadcast %34 : vector<1x1x4xf32> to vector<8x16x4xf32>
    %36 = arith.mulf %31, %35 : vector<8x16x4xf32>
    %37 = arith.addf %30, %36 : vector<8x16x4xf32>
    %38 = vector.extract_strided_slice %9 {offsets = [1, 0, 0], sizes = [8, 16, 4], strides = [1, 1, 1]} : vector<10x16x4xf32> to vector<8x16x4xf32>
    %39 = vector.extract_strided_slice %7 {offsets = [1, 1, 0], sizes = [1, 1, 4], strides = [1, 1, 1]} : vector<3x3x4xf32> to vector<1x1x4xf32>
    %40 = vector.shape_cast %39 : vector<1x1x4xf32> to vector<4xf32>
    %41 = vector.shape_cast %40 : vector<4xf32> to vector<1x1x4xf32>
    %42 = vector.broadcast %41 : vector<1x1x4xf32> to vector<8x16x4xf32>
    %43 = arith.mulf %38, %42 : vector<8x16x4xf32>
    %44 = arith.addf %37, %43 : vector<8x16x4xf32>
    %45 = vector.extract_strided_slice %9 {offsets = [2, 0, 0], sizes = [8, 16, 4], strides = [1, 1, 1]} : vector<10x16x4xf32> to vector<8x16x4xf32>
    %46 = vector.extract_strided_slice %7 {offsets = [2, 1, 0], sizes = [1, 1, 4], strides = [1, 1, 1]} : vector<3x3x4xf32> to vector<1x1x4xf32>
    %47 = vector.shape_cast %46 : vector<1x1x4xf32> to vector<4xf32>
    %48 = vector.shape_cast %47 : vector<4xf32> to vector<1x1x4xf32>
    %49 = vector.broadcast %48 : vector<1x1x4xf32> to vector<8x16x4xf32>
    %50 = arith.mulf %45, %49 : vector<8x16x4xf32>
    %51 = arith.addf %44, %50 : vector<8x16x4xf32>
    %52 = vector.extract_strided_slice %10 {offsets = [0, 0, 0], sizes = [8, 16, 4], strides = [1, 1, 1]} : vector<10x16x4xf32> to vector<8x16x4xf32>
    %53 = vector.extract_strided_slice %7 {offsets = [0, 2, 0], sizes = [1, 1, 4], strides = [1, 1, 1]} : vector<3x3x4xf32> to vector<1x1x4xf32>
    %54 = vector.shape_cast %53 : vector<1x1x4xf32> to vector<4xf32>
    %55 = vector.shape_cast %54 : vector<4xf32> to vector<1x1x4xf32>
    %56 = vector.broadcast %55 : vector<1x1x4xf32> to vector<8x16x4xf32>
    %57 = arith.mulf %52, %56 : vector<8x16x4xf32>
    %58 = arith.addf %51, %57 : vector<8x16x4xf32>
    %59 = vector.extract_strided_slice %10 {offsets = [1, 0, 0], sizes = [8, 16, 4], strides = [1, 1, 1]} : vector<10x16x4xf32> to vector<8x16x4xf32>
    %60 = vector.extract_strided_slice %7 {offsets = [1, 2, 0], sizes = [1, 1, 4], strides = [1, 1, 1]} : vector<3x3x4xf32> to vector<1x1x4xf32>
    %61 = vector.shape_cast %60 : vector<1x1x4xf32> to vector<4xf32>
    %62 = vector.shape_cast %61 : vector<4xf32> to vector<1x1x4xf32>
    %63 = vector.broadcast %62 : vector<1x1x4xf32> to vector<8x16x4xf32>
    %64 = arith.mulf %59, %63 : vector<8x16x4xf32>
    %65 = arith.addf %58, %64 : vector<8x16x4xf32>
    %66 = vector.extract_strided_slice %10 {offsets = [2, 0, 0], sizes = [8, 16, 4], strides = [1, 1, 1]} : vector<10x16x4xf32> to vector<8x16x4xf32>
    %67 = vector.extract_strided_slice %7 {offsets = [2, 2, 0], sizes = [1, 1, 4], strides = [1, 1, 1]} : vector<3x3x4xf32> to vector<1x1x4xf32>
    %68 = vector.shape_cast %67 : vector<1x1x4xf32> to vector<4xf32>
    %69 = vector.shape_cast %68 : vector<4xf32> to vector<1x1x4xf32>
    %70 = vector.broadcast %69 : vector<1x1x4xf32> to vector<8x16x4xf32>
    %71 = arith.mulf %66, %70 : vector<8x16x4xf32>
    %72 = arith.addf %65, %71 : vector<8x16x4xf32>
    %73 = vector.shape_cast %72 : vector<8x16x4xf32> to vector<128x4xf32>
    %c0_14 = arith.constant 0 : index
    %c0_15 = arith.constant 0 : index
    %74 = vector.load %arg6[%c0_14, %c0_15] : memref<8x4xf32, #tpu.memory_space<vmem>>, vector<8x4xf32>
    %cst = arith.constant dense<0.000000e+00> : vector<8x128xf32>
    %75 = tpu.matmul %74, %73, %cst {dimension_numbers = #tpu.dot_dimension_numbers<[1], [1], [0], [0], [0, 0, 1, 0], [], []>} : vector<8x4xf32>, vector<128x4xf32>, vector<8x128xf32> -> vector<8x128xf32>
    %c0_16 = arith.constant 0 : index
    %c0_17 = arith.constant 0 : index
    %76 = vector.load %arg7[%c0_16, %c0_17] : memref<8x1xf32, #tpu.memory_space<vmem>>, vector<8x1xf32>
    %77 = vector.broadcast %76 : vector<8x1xf32> to vector<8x128xf32>
    %78 = arith.addf %75, %77 : vector<8x128xf32>
    %c0_18 = arith.constant 0 : index
    %c0_19 = arith.constant 0 : index
    %c0_20 = arith.constant 0 : index
    %79 = vector.load %arg8[%c0_18, %c0_19, %c0_20] : memref<1x8x128xf32, #tpu.memory_space<vmem>>, vector<1x8x128xf32>
    %80 = vector.shape_cast %79 : vector<1x8x128xf32> to vector<8x128xf32>
    %81 = vector.shape_cast %78 : vector<8x128xf32> to vector<1x8x128xf32>
    tpu.vector_store %arg8[%c0_18, %c0_19, %c0_20], %81 {strides = array<i32>} : memref<1x8x128xf32, #tpu.memory_space<vmem>>, vector<1x8x128xf32>,
    return
  }
  func.func @transform_0(%arg0: i32, %arg1: i32) -> (i32, i32, i32, i32) {
    %c0_i32 = arith.constant 0 : i32
    %c0_i32_0 = arith.constant 0 : i32
    %c0_i32_1 = arith.constant 0 : i32
    return %arg0, %arg1, %c0_i32, %c0_i32_0 : i32, i32, i32, i32
  }
  func.func @transform_1(%arg0: i32, %arg1: i32) -> (i32, i32, i32, i32) {
    %c8_i32 = arith.constant 8 : i32
    %0 = arith.muli %arg1, %c8_i32 : i32
    %c8_i32_0 = arith.constant 8 : i32
    %1 = arith.addi %0, %c8_i32_0 : i32
    %c0_i32 = arith.constant 0 : i32
    %c0_i32_1 = arith.constant 0 : i32
    %c0_i32_2 = arith.constant 0 : i32
    return %arg0, %1, %c0_i32, %c0_i32_1 : i32, i32, i32, i32
  }
  func.func @transform_2(%arg0: i32, %arg1: i32) -> (i32, i32, i32, i32) {
    %c8_i32 = arith.constant 8 : i32
    %0 = arith.muli %arg1, %c8_i32 : i32
    %c8_i32_0 = arith.constant 8 : i32
    %1 = arith.addi %0, %c8_i32_0 : i32
    %c1_i32 = arith.constant 1 : i32
    %2 = arith.addi %1, %c1_i32 : i32
    %c0_i32 = arith.constant 0 : i32
    %c0_i32_1 = arith.constant 0 : i32
    %c0_i32_2 = arith.constant 0 : i32
    return %arg0, %2, %c0_i32, %c0_i32_1 : i32, i32, i32, i32
  }
  func.func @transform_3(%arg0: i32, %arg1: i32) -> (i32, i32, i32) {
    %c0_i32 = arith.constant 0 : i32
    %c0_i32_0 = arith.constant 0 : i32
    %c0_i32_1 = arith.constant 0 : i32
    %c0_i32_2 = arith.constant 0 : i32
    return %c0_i32, %c0_i32_0, %c0_i32_1 : i32, i32, i32
  }
  func.func @transform_4(%arg0: i32, %arg1: i32) -> (i32, i32) {
    %c0_i32 = arith.constant 0 : i32
    %c0_i32_0 = arith.constant 0 : i32
    %c0_i32_1 = arith.constant 0 : i32
    return %c0_i32, %c0_i32_0 : i32, i32
  }
  func.func @transform_5(%arg0: i32, %arg1: i32) -> (i32, i32) {
    %c0_i32 = arith.constant 0 : i32
    %c0_i32_0 = arith.constant 0 : i32
    %c0_i32_1 = arith.constant 0 : i32
    return %c0_i32, %c0_i32_0 : i32, i32
  }
  func.func @transform_6(%arg0: i32, %arg1: i32) -> (i32, i32, i32) {
    %c0_i32 = arith.constant 0 : i32
    %c0_i32_0 = arith.constant 0 : i32
    return %arg0, %c0_i32, %arg1 : i32, i32, i32
  }
}

</mosaic_0001>

<llo_original>
// kernel: tpu_custom_call.1
$region0: #{tpu_custom_call.1}
  #allocation0 [shape = 'u32[]', space=smem, size = 0x4, offset = 0x4, fixed_abs, tag = 'smem constant byte address 0x4 - core index']
  #allocation1 [shape = 'u32[144,128]{1,0:T(1,128)}', space=vmem, size = 0x12000, scoped, tag = 'internal scratch']
  %s0 = inlined_call_operand.vmem [shape: f32[2,18,18,4], index: 0, kind: input, shape index: {}]
  %s1 = inlined_call_operand.vmem [shape: f32[2,18,18,4], index: 1, kind: input, shape index: {}]
  %s2 = inlined_call_operand.vmem [shape: f32[2,18,18,4], index: 2, kind: input, shape index: {}]
  %s3 = inlined_call_operand.vmem [shape: f32[3,3,4], index: 3, kind: input, shape index: {}]
  %s4 = inlined_call_operand.vmem [shape: f32[8,4], index: 4, kind: input, shape index: {}]
  %s5 = inlined_call_operand.vmem [shape: f32[8,1], index: 5, kind: input, shape index: {}]
  %s6 = inlined_call_operand.hbm [shape: f32[2,8,256], index: 6, kind: output, shape index: {}]
  %s7 = sld [smem:[#allocation0]]
  $region57: #{tpu_custom_call.1} parent=0
    _
  %s9 = ssub.s32 1, %s7
  %s10 = scalar_select 0, %s9, %s7
  $region1: #{tpu_custom_call.1} parent=0
    #allocation2 [shape = 'u8[8192]{0}', space=vmem, size = 0x2000, scoped, tag = 'output window, operand 0']
    #allocation3 [shape = 's32[2]{0}', space=sflag, size = 0x8, scoped, tag = 'scoped memory for tpu_custom_call.1']
    %11 = vsyncpa [#allocation3], 0
    %s12 = scalar_lea.sflag [#allocation3], 1
    %13 = vsyncpa %s12, 0
    loop: start=0, step=1, limit=6
    $region2: #{tpu_custom_call.1} parent=1 // loop_pre_header
      _
    $region3: #{tpu_custom_call.1} parent=1 // loop_header
      %s15 = sphi 0, %s19
      %p16 = scmp.ge.s32.totalorder %s15, 6
      %s22 = sphi 0, %s34
      %s23 = sphi 0, %s30
      %s24 = sphi 0, %s22
      %s25 = sphi 0, %s23
      %s26 = sphi 0, %s24
      %s27 = sphi 0, %s25
      %s39 = sphi 0, %s41
      %s42 = sphi 0, %s39
      %s43 = sphi 0, %s42
      %s59 = sphi 0, %s43
      %s71 = sphi 0, %s73
      %s74 = sphi 0, %s71
      %s75 = sphi 0, %s74
      %s91 = sphi 0, %s75
      %s103 = sphi 0, %s105
      %s106 = sphi 0, %s103
      %s107 = sphi 0, %s106
      %s123 = sphi 0, %s107
      %s127 = sphi 0, %s127
      %s129 = sphi 0, %s127
      %s130 = sphi 0, %s129
      %s144 = sphi 0, %s130
      %s148 = sphi 0, %s148
      %s150 = sphi 0, %s148
      %s151 = sphi 0, %s150
      %s165 = sphi 0, %s151
      %s169 = sphi 0, %s169
      %s171 = sphi 0, %s169
      %s172 = sphi 0, %s171
      %s186 = sphi 0, %s172
      %s194 = sphi 0, %s196
      %s197 = sphi 0, %s194
      %s198 = sphi 0, %s197
      %s214 = sphi 0, %s198
    $region4: #{tpu_custom_call.1} parent=1 // loop_header_branch
      %18 = sbr.rel (%p16) target = $region8
    $region5: #{tpu_custom_call.1} parent=1 // loop_body
      %s20 = ssub.s32 %s15, 1
      %s21 = ssub.s32 %s15, 2
      %s28 = sadd.s32 1, %s23
      %p29 = scmp.ge.s32.totalorder %s28, 2
      %s30 = scalar_select %p29, 0, %s28
      %s31 = sadd.s32 1, %s22
      %s32 = scalar_select %p29, %s31, %s22
      %p33 = scmp.ge.s32.totalorder %s32, 2
      %s34 = scalar_select %p33, 0, %s32
      %s35 = ssub.s32 %s22, %s34
      %s36 = ssub.s32 %s23, %s30
      %s37 = sor.u32 %s35, %s36
      %p38 = scmp.eq.s32.totalorder %s37, 0
      %s40 = sadd.s32 %s39, 1
      %s41 = scalar_select %p38, %s39, %s40
      %p44 = pneg %p38
      %p45 = scmp.eq.s32.totalorder %s15, 3
      %p46 = por %p44, %p45
      %p47 = scmp.ne.s32.totalorder %s39, %s42
      %p48 = scmp.eq.s32.totalorder %s15, 0
      %p49 = por %p47, %p48
      %p50 = scmp.ne.s32.totalorder %s39, %s42
      %p51 = scmp.eq.s32.totalorder %s20, 3
      %p52 = por %p50, %p51
      %p53 = scmp.ne.s32.totalorder %s42, %s43
      %p54 = scmp.eq.s32.totalorder %s20, 0
      %p55 = por %p53, %p54
      %p56 = scmp.ne.s32.totalorder %s42, %s43
      %p57 = scmp.eq.s32.totalorder %s21, 3
      %p58 = por %p56, %p57
      %p60 = scmp.ne.s32.totalorder %s43, %s59
      %p61 = scmp.eq.s32.totalorder %s21, 0
      %p62 = por %p60, %p61
      %s63 = smul.u32 %s23, 8
      %s64 = sadd.s32 %s63, 8
      %s65 = smul.u32 %s30, 8
      %s66 = sadd.s32 %s65, 8
      %s67 = ssub.s32 %s22, %s34
      %s68 = ssub.s32 %s64, %s66
      %s69 = sor.u32 %s67, %s68
      %p70 = scmp.eq.s32.totalorder %s69, 0
      %s72 = sadd.s32 %s71, 1
      %s73 = scalar_select %p70, %s71, %s72
      %p76 = pneg %p70
      %p77 = scmp.eq.s32.totalorder %s15, 3
      %p78 = por %p76, %p77
      %p79 = scmp.ne.s32.totalorder %s71, %s74
      %p80 = scmp.eq.s32.totalorder %s15, 0
      %p81 = por %p79, %p80
      %p82 = scmp.ne.s32.totalorder %s71, %s74
      %p83 = scmp.eq.s32.totalorder %s20, 3
      %p84 = por %p82, %p83
      %p85 = scmp.ne.s32.totalorder %s74, %s75
      %p86 = scmp.eq.s32.totalorder %s20, 0
      %p87 = por %p85, %p86
      %p88 = scmp.ne.s32.totalorder %s74, %s75
      %p89 = scmp.eq.s32.totalorder %s21, 3
      %p90 = por %p88, %p89
      %p92 = scmp.ne.s32.totalorder %s75, %s91
      %p93 = scmp.eq.s32.totalorder %s21, 0
      %p94 = por %p92, %p93
      %s95 = smul.u32 %s23, 8
      %s96 = sadd.s32 %s95, 9
      %s97 = smul.u32 %s30, 8
      %s98 = sadd.s32 %s97, 9
      %s99 = ssub.s32 %s22, %s34
      %s100 = ssub.s32 %s96, %s98
      %s101 = sor.u32 %s99, %s100
      %p102 = scmp.eq.s32.totalorder %s101, 0
      %s104 = sadd.s32 %s103, 1
      %s105 = scalar_select %p102, %s103, %s104
      %p108 = pneg %p102
      %p109 = scmp.eq.s32.totalorder %s15, 3
      %p110 = por %p108, %p109
      %p111 = scmp.ne.s32.totalorder %s103, %s106
      %p112 = scmp.eq.s32.totalorder %s15, 0
      %p113 = por %p111, %p112
      %p114 = scmp.ne.s32.totalorder %s103, %s106
      %p115 = scmp.eq.s32.totalorder %s20, 3
      %p116 = por %p114, %p115
      %p117 = scmp.ne.s32.totalorder %s106, %s107
      %p118 = scmp.eq.s32.totalorder %s20, 0
      %p119 = por %p117, %p118
      %p120 = scmp.ne.s32.totalorder %s106, %s107
      %p121 = scmp.eq.s32.totalorder %s21, 3
      %p122 = por %p120, %p121
      %p124 = scmp.ne.s32.totalorder %s107, %s123
      %p125 = scmp.eq.s32.totalorder %s21, 0
      %p126 = por %p124, %p125
      %s128 = sadd.s32 %s127, 1
      %p131 = scmp.eq.s32.totalorder %s15, 3
      %p132 = scmp.ne.s32.totalorder %s127, %s129
      %p133 = scmp.eq.s32.totalorder %s15, 0
      %p134 = por %p132, %p133
      %p135 = scmp.ne.s32.totalorder %s127, %s129
      %p136 = scmp.eq.s32.totalorder %s20, 3
      %p137 = por %p135, %p136
      %p138 = scmp.ne.s32.totalorder %s129, %s130
      %p139 = scmp.eq.s32.totalorder %s20, 0
      %p140 = por %p138, %p139
      %p141 = scmp.ne.s32.totalorder %s129, %s130
      %p142 = scmp.eq.s32.totalorder %s21, 3
      %p143 = por %p141, %p142
      %p145 = scmp.ne.s32.totalorder %s130, %s144
      %p146 = scmp.eq.s32.totalorder %s21, 0
      %p147 = por %p145, %p146
      %s149 = sadd.s32 %s148, 1
      %p152 = scmp.eq.s32.totalorder %s15, 3
      %p153 = scmp.ne.s32.totalorder %s148, %s150
      %p154 = scmp.eq.s32.totalorder %s15, 0
      %p155 = por %p153, %p154
      %p156 = scmp.ne.s32.totalorder %s148, %s150
      %p157 = scmp.eq.s32.totalorder %s20, 3
      %p158 = por %p156, %p157
      %p159 = scmp.ne.s32.totalorder %s150, %s151
      %p160 = scmp.eq.s32.totalorder %s20, 0
      %p161 = por %p159, %p160
      %p162 = scmp.ne.s32.totalorder %s150, %s151
      %p163 = scmp.eq.s32.totalorder %s21, 3
      %p164 = por %p162, %p163
      %p166 = scmp.ne.s32.totalorder %s151, %s165
      %p167 = scmp.eq.s32.totalorder %s21, 0
      %p168 = por %p166, %p167
      %s170 = sadd.s32 %s169, 1
      %p173 = scmp.eq.s32.totalorder %s15, 3
      %p174 = scmp.ne.s32.totalorder %s169, %s171
      %p175 = scmp.eq.s32.totalorder %s15, 0
      %p176 = por %p174, %p175
      %p177 = scmp.ne.s32.totalorder %s169, %s171
      %p178 = scmp.eq.s32.totalorder %s20, 3
      %p179 = por %p177, %p178
      %p180 = scmp.ne.s32.totalorder %s171, %s172
      %p181 = scmp.eq.s32.totalorder %s20, 0
      %p182 = por %p180, %p181
      %p183 = scmp.ne.s32.totalorder %s171, %s172
      %p184 = scmp.eq.s32.totalorder %s21, 3
      %p185 = por %p183, %p184
      %p187 = scmp.ne.s32.totalorder %s172, %s186
      %p188 = scmp.eq.s32.totalorder %s21, 0
      %p189 = por %p187, %p188
      %s190 = ssub.s32 %s22, %s34
      %s191 = ssub.s32 %s23, %s30
      %s192 = sor.u32 %s190, %s191
      %p193 = scmp.eq.s32.totalorder %s192, 0
      %s195 = sadd.s32 %s194, 1
      %s196 = scalar_select %p193, %s194, %s195
      %p199 = pneg %p193
      %p200 = scmp.eq.s32.totalorder %s15, 3
      %p201 = por %p199, %p200
      %p202 = scmp.ne.s32.totalorder %s194, %s197
      %p203 = scmp.eq.s32.totalorder %s15, 0
      %p204 = por %p202, %p203
      %p205 = scmp.ne.s32.totalorder %s194, %s197
      %p206 = scmp.eq.s32.totalorder %s20, 3
      %p207 = por %p205, %p206
      %p208 = scmp.ne.s32.totalorder %s197, %s198
      %p209 = scmp.eq.s32.totalorder %s20, 0
      %p210 = por %p208, %p209
      %p211 = scmp.ne.s32.totalorder %s197, %s198
      %p212 = scmp.eq.s32.totalorder %s21, 3
      %p213 = por %p211, %p212
      %p215 = scmp.ne.s32.totalorder %s198, %s214
      %p216 = scmp.eq.s32.totalorder %s21, 0
      %p217 = por %p215, %p216
      %p218 = scmp.le.s32.totalorder 1, %s15
      %p219 = scmp.lt.s32.totalorder %s15, 5
      %p220 = pnand %p218, %p219
      %p221 = pneg %p220
      // Predicated region
      $region9: #{tpu_custom_call.1} parent=5 // pred_check
        _
      $region10: #{tpu_custom_call.1} parent=5 // pred_check_branch
        %223 = sbr.rel (%p220) target = $region12
      $region11: #{tpu_custom_call.1} parent=5 // pred_region
        %s224 = ssub.s32 %s15, 1
        // Predicated region
        $region13: #{tpu_custom_call.1} parent=11 // pred_check
          %p225 = pneg %p140
        $region14: #{tpu_custom_call.1} parent=11 // pred_check_branch
          %227 = sbr.rel (%p225) target = $region16
        $region15: #{tpu_custom_call.1} parent=11 // pred_region
          _
        $region16: #{tpu_custom_call.1} parent=11 // pred_fallthru
          _
        // Predicated region
        $region17: #{tpu_custom_call.1} parent=11 // pred_check
          %p228 = pneg %p161
        $region18: #{tpu_custom_call.1} parent=11 // pred_check_branch
          %230 = sbr.rel (%p228) target = $region20
        $region19: #{tpu_custom_call.1} parent=11 // pred_region
          _
        $region20: #{tpu_custom_call.1} parent=11 // pred_fallthru
          _
        // Predicated region
        $region21: #{tpu_custom_call.1} parent=11 // pred_check
          %p231 = pneg %p182
        $region22: #{tpu_custom_call.1} parent=11 // pred_check_branch
          %233 = sbr.rel (%p231) target = $region24
        $region23: #{tpu_custom_call.1} parent=11 // pred_region
          _
        $region24: #{tpu_custom_call.1} parent=11 // pred_fallthru
          _
      $region12: #{tpu_custom_call.1} parent=5 // pred_fallthru
        _
      %p234 = scmp.lt.s32.totalorder %s15, 4
      // Predicated region
      $region25: #{tpu_custom_call.1} parent=5 // pred_check
        %p235 = pneg %p234
      $region26: #{tpu_custom_call.1} parent=5 // pred_check_branch
        %237 = sbr.rel (%p235) target = $region28
      $region27: #{tpu_custom_call.1} parent=5 // pred_region
        // Predicated region
        $region29: #{tpu_custom_call.1} parent=27 // pred_check
          %p238 = pneg %p49
        $region30: #{tpu_custom_call.1} parent=27 // pred_check_branch
          %240 = sbr.rel (%p238) target = $region32
        $region31: #{tpu_custom_call.1} parent=27 // pred_region
          %s241 = smul.u32 8, %s23
          %s242 = ssub.s32 18, %s241
          %p243 = scmp.lt.s32.totalorder %s242, 8
          %s244 = scalar_select %p243, %s242, 8
          %s245 = smul.u32 128, %s244
          %s246 = smul.u32 %s245, 3
          %p247 = scmp.lt.s32.totalorder %s22, 1
          %s248 = scalar_select %p247, %s22, 1
          %p249 = scmp.lt.s32.totalorder %s241, 17
          %s250 = scalar_select %p249, %s241, 17
          %s251 = smul.addr %s250, 3
          %s252 = smul.addr %s248, 54
          %s253 = sadd.s32 %s251, %s252
          %s254 = smul.addr %s253, 8
          %s255 = scalar_lea.vmem %s0, %s254
          %s256 = smul.u32 8, %s23
          %s257 = ssub.s32 18, %s256
          %p258 = scmp.lt.s32.totalorder %s257, 8
          %s259 = scalar_select %p258, %s257, 8
          %s260 = smul.u32 128, %s259
          %s261 = smul.u32 %s260, 3
        $region32: #{tpu_custom_call.1} parent=27 // pred_fallthru
          _
        // Predicated region
        $region33: #{tpu_custom_call.1} parent=27 // pred_check
          %p262 = pneg %p81
        $region34: #{tpu_custom_call.1} parent=27 // pred_check_branch
          %264 = sbr.rel (%p262) target = $region36
        $region35: #{tpu_custom_call.1} parent=27 // pred_region
          %s265 = smul.u32 %s23, 8
          %s266 = sadd.s32 %s265, 8
          %p267 = scmp.lt.s32.totalorder %s22, 1
          %s268 = scalar_select %p267, %s22, 1
          %p269 = scmp.lt.s32.totalorder %s266, 17
          %s270 = scalar_select %p269, %s266, 17
          %s271 = smul.addr %s270, 3
          %s272 = smul.addr %s268, 54
          %s273 = sadd.s32 %s271, %s272
          %s274 = smul.addr %s273, 8
          %s275 = scalar_lea.vmem %s1, %s274
          %s276 = smul.u32 %s23, 8
          %s277 = sadd.s32 %s276, 8
        $region36: #{tpu_custom_call.1} parent=27 // pred_fallthru
          _
        // Predicated region
        $region37: #{tpu_custom_call.1} parent=27 // pred_check
          %p278 = pneg %p113
        $region38: #{tpu_custom_call.1} parent=27 // pred_check_branch
          %280 = sbr.rel (%p278) target = $region40
        $region39: #{tpu_custom_call.1} parent=27 // pred_region
          %s281 = smul.u32 %s23, 8
          %s282 = sadd.s32 %s281, 9
          %p283 = scmp.lt.s32.totalorder %s22, 1
          %s284 = scalar_select %p283, %s22, 1
          %p285 = scmp.lt.s32.totalorder %s282, 17
          %s286 = scalar_select %p285, %s282, 17
          %s287 = smul.addr %s286, 3
          %s288 = smul.addr %s284, 54
          %s289 = sadd.s32 %s287, %s288
          %s290 = smul.addr %s289, 8
          %s291 = scalar_lea.vmem %s2, %s290
          %s292 = smul.u32 %s23, 8
          %s293 = sadd.s32 %s292, 9
        $region40: #{tpu_custom_call.1} parent=27 // pred_fallthru
          _
      $region28: #{tpu_custom_call.1} parent=5 // pred_fallthru
        _
      %p294 = scmp.le.s32.totalorder 1, %s15
      %p295 = scmp.lt.s32.totalorder %s15, 5
      %p296 = pnand %p294, %p295
      %p297 = pneg %p296
      // Predicated region
      $region41: #{tpu_custom_call.1} parent=5 // pred_check
        _
      $region42: #{tpu_custom_call.1} parent=5 // pred_check_branch
        %299 = sbr.rel (%p296) target = $region44
      $region43: #{tpu_custom_call.1} parent=5 // pred_region
        %s300 = ssub.s32 %s15, 1
        %s301 = smul.u32 8, %s25
        %s302 = ssub.s32 18, %s301
        %p303 = scmp.lt.s32.totalorder %s302, 8
        %s304 = scalar_select %p303, %s302, 8
        %s305 = smul.u32 128, %s304
        %s306 = smul.u32 %s305, 3
        %p307 = scmp.lt.s32.totalorder %s24, 1
        %s308 = scalar_select %p307, %s24, 1
        %p309 = scmp.lt.s32.totalorder %s301, 17
        %s310 = scalar_select %p309, %s301, 17
        %s311 = smul.addr %s310, 3
        %s312 = smul.addr %s308, 54
        %s313 = sadd.s32 %s311, %s312
        %s314 = smul.addr %s313, 8
        %s315 = scalar_lea.vmem %s0, %s314
        %p316 = pneg %p55
        %p317 = pneg %p52
        %s318 = smul.u32 %s25, 8
        %s319 = sadd.s32 %s318, 8
        %p320 = scmp.lt.s32.totalorder %s24, 1
        %s321 = scalar_select %p320, %s24, 1
        %p322 = scmp.lt.s32.totalorder %s319, 17
        %s323 = scalar_select %p322, %s319, 17
        %s324 = smul.addr %s323, 3
        %s325 = smul.addr %s321, 54
        %s326 = sadd.s32 %s324, %s325
        %s327 = smul.addr %s326, 8
        %s328 = scalar_lea.vmem %s1, %s327
        %p329 = pneg %p87
        %p330 = pneg %p84
        %s331 = smul.u32 %s25, 8
        %s332 = sadd.s32 %s331, 9
        %p333 = scmp.lt.s32.totalorder %s24, 1
        %s334 = scalar_select %p333, %s24, 1
        %p335 = scmp.lt.s32.totalorder %s332, 17
        %s336 = scalar_select %p335, %s332, 17
        %s337 = smul.addr %s336, 3
        %s338 = smul.addr %s334, 54
        %s339 = sadd.s32 %s337, %s338
        %s340 = smul.addr %s339, 8
        %s341 = scalar_lea.vmem %s2, %s340
        %p342 = pneg %p119
        %p343 = pneg %p116
        %p344 = pneg %p140
        %p345 = pneg %p137
        %p346 = pneg %p161
        %p347 = pneg %p158
        %p348 = pneg %p182
        %p349 = pneg %p179
        %p350 = pneg %p210
        %p351 = pneg %p207
        %s352 = sand.u32 %s197, 1
        %s353 = scalar_lea.sflag [#allocation3], %s352
        %s354 = sand.u32 %s197, 1
        %s355 = smul.addr %s354, 8
        %s356 = scalar_lea.vmem [#allocation2], %s355
        %s357 = smul.u32 8, %s25
        %s358 = ssub.s32 18, %s357
        %p359 = scmp.lt.s32.totalorder %s358, 8
        %s360 = scalar_select %p359, %s358, 8
        %s361 = smul.u32 128, %s360
        %s362 = smul.u32 %s361, 3
        %p363 = scmp.lt.s32.totalorder %s24, 1
        %s364 = scalar_select %p363, %s24, 1
        %p365 = scmp.lt.s32.totalorder %s357, 17
        %s366 = scalar_select %p365, %s357, 17
        %s367 = smul.addr %s366, 3
        %s368 = smul.addr %s364, 54
        %s369 = sadd.s32 %s367, %s368
        %s370 = smul.addr %s369, 8
        %s371 = scalar_lea.vmem %s0, %s370
        %s372 = smul.u32 8, %s25
        %s373 = ssub.s32 18, %s372
        %p374 = scmp.lt.s32.totalorder %s373, 8
        %s375 = scalar_select %p374, %s373, 8
        %s376 = smul.u32 128, %s375
        %s377 = smul.u32 %s376, 3
        %s378 = smul.u32 %s25, 8
        %s379 = sadd.s32 %s378, 8
        %p380 = scmp.lt.s32.totalorder %s24, 1
        %s381 = scalar_select %p380, %s24, 1
        %p382 = scmp.lt.s32.totalorder %s379, 17
        %s383 = scalar_select %p382, %s379, 17
        %s384 = smul.addr %s383, 3
        %s385 = smul.addr %s381, 54
        %s386 = sadd.s32 %s384, %s385
        %s387 = smul.addr %s386, 8
        %s388 = scalar_lea.vmem %s1, %s387
        %s389 = smul.u32 %s25, 8
        %s390 = sadd.s32 %s389, 8
        %s391 = smul.u32 %s25, 8
        %s392 = sadd.s32 %s391, 9
        %p393 = scmp.lt.s32.totalorder %s24, 1
        %s394 = scalar_select %p393, %s24, 1
        %p395 = scmp.lt.s32.totalorder %s392, 17
        %s396 = scalar_select %p395, %s392, 17
        %s397 = smul.addr %s396, 3
        %s398 = smul.addr %s394, 54
        %s399 = sadd.s32 %s397, %s398
        %s400 = smul.addr %s399, 8
        %s401 = scalar_lea.vmem %s2, %s400
        %s402 = smul.u32 %s25, 8
        %s403 = sadd.s32 %s402, 9
        %v404 = vld [vmem:[%s371] sm:$0xff]
        %v405 = vld [vmem:[%s371 + $0x8] sm:$0xff]
        %v406 = vld [vmem:[%s371 + $0x10] sm:$0x3]
        %v407 = vld [vmem:[%s371 + $0x18] sm:$0xff]
        %v408 = vld [vmem:[%s371 + $0x20] sm:$0xff]
        %v409 = vld [vmem:[%s371 + $0x28] sm:$0x3]
        %v410 = vld [vmem:[%s371 + $0x30] sm:$0xff]
        %v411 = vld [vmem:[%s371 + $0x38] sm:$0xff]
        %v412 = vld [vmem:[%s371 + $0x40] sm:$0x3]
        %v413 = vld [vmem:[%s371 + $0x48] sm:$0xff]
        %v414 = vld [vmem:[%s371 + $0x50] sm:$0xff]
        %v415 = vld [vmem:[%s371 + $0x58] sm:$0x3]
        %v416 = vld [vmem:[%s371 + $0x60] sm:$0xff]
        %v417 = vld [vmem:[%s371 + $0x68] sm:$0xff]
        %v418 = vld [vmem:[%s371 + $0x70] sm:$0x3]
        %v419 = vld [vmem:[%s371 + $0x78] sm:$0xff]
        %v420 = vld [vmem:[%s371 + $0x80] sm:$0xff]
        %v421 = vld [vmem:[%s371 + $0x88] sm:$0x3]
        %v422 = vld [vmem:[%s371 + $0x90] sm:$0xff]
        %v423 = vld [vmem:[%s371 + $0x98] sm:$0xff]
        %v424 = vld [vmem:[%s371 + $0xa0] sm:$0x3]
        %v425 = vld [vmem:[%s371 + $0xa8] sm:$0xff]
        %v426 = vld [vmem:[%s371 + $0xb0] sm:$0xff]
        %v427 = vld [vmem:[%s371 + $0xb8] sm:$0x3]
        %v428 = vld [vmem:[%s388] sm:$0xff]
        %v429 = vld [vmem:[%s388 + $0x8] sm:$0xff]
        %v430 = vld [vmem:[%s388 + $0x10] sm:$0x3]
        %v431 = vld [vmem:[%s401] sm:$0xff]
        %v432 = vld [vmem:[%s401 + $0x8] sm:$0xff]
        %v433 = vld [vmem:[%s401 + $0x10] sm:$0x3]
        %v434 = vld [vmem:[%s3] sm:$0x7]
        %v435 = vld [vmem:[%s3 + $0x4] sm:$0x7]
        %v436 = vld [vmem:[%s3 + $0x8] sm:$0x7]
        %v437 = vlaneseq
        %v438 = vshrl.u32 %v437, 7
        %v439 = vsub.s32 0, %v438
        %v440 = vrot.slane %v434, %v439
        %v441 = vmul.f32 %v404, %v440
        %v442 = vmul.f32 %v405, %v440
        %v443 = vmul.f32 %v407, %v440
        %v444 = vmul.f32 %v408, %v440
        %v445 = vmul.f32 %v410, %v440
        %v446 = vmul.f32 %v411, %v440
        %v447 = vmul.f32 %v413, %v440
        %v448 = vmul.f32 %v414, %v440
        %v449 = vmul.f32 %v416, %v440
        %v450 = vmul.f32 %v417, %v440
        %v451 = vmul.f32 %v419, %v440
        %v452 = vmul.f32 %v420, %v440
        %v453 = vmul.f32 %v422, %v440
        %v454 = vmul.f32 %v423, %v440
        %v455 = vmul.f32 %v425, %v440
        %v456 = vmul.f32 %v426, %v440
        %v457 = vlaneseq
        %v458 = vshrl.u32 %v457, 7
        %v459 = vsub.s32 0, %v458
        %v460 = vrot.slane %v435, %v459
        %v461 = vmul.f32 %v407, %v460
        %v462 = vmul.f32 %v408, %v460
        %v463 = vmul.f32 %v410, %v460
        %v464 = vmul.f32 %v411, %v460
        %v465 = vmul.f32 %v413, %v460
        %v466 = vmul.f32 %v414, %v460
        %v467 = vmul.f32 %v416, %v460
        %v468 = vmul.f32 %v417, %v460
        %v469 = vmul.f32 %v419, %v460
        %v470 = vmul.f32 %v420, %v460
        %v471 = vmul.f32 %v422, %v460
        %v472 = vmul.f32 %v423, %v460
        %v473 = vmul.f32 %v425, %v460
        %v474 = vmul.f32 %v426, %v460
        %v475 = vmul.f32 %v428, %v460
        %v476 = vmul.f32 %v429, %v460
        %v477 = vadd.f32 %v441, %v461
        %v478 = vadd.f32 %v442, %v462
        %v479 = vadd.f32 %v443, %v463
        %v480 = vadd.f32 %v444, %v464
        %v481 = vadd.f32 %v445, %v465
        %v482 = vadd.f32 %v446, %v466
        %v483 = vadd.f32 %v447, %v467
        %v484 = vadd.f32 %v448, %v468
        %v485 = vadd.f32 %v449, %v469
        %v486 = vadd.f32 %v450, %v470
        %v487 = vadd.f32 %v451, %v471
        %v488 = vadd.f32 %v452, %v472
        %v489 = vadd.f32 %v453, %v473
        %v490 = vadd.f32 %v454, %v474
        %v491 = vadd.f32 %v455, %v475
        %v492 = vadd.f32 %v456, %v476
        %v493 = vlaneseq
        %v494 = vshrl.u32 %v493, 7
        %v495 = vsub.s32 0, %v494
        %v496 = vrot.slane %v436, %v495
        %v497 = vmul.f32 %v410, %v496
        %v498 = vmul.f32 %v411, %v496
        %v499 = vmul.f32 %v413, %v496
        %v500 = vmul.f32 %v414, %v496
        %v501 = vmul.f32 %v416, %v496
        %v502 = vmul.f32 %v417, %v496
        %v503 = vmul.f32 %v419, %v496
        %v504 = vmul.f32 %v420, %v496
        %v505 = vmul.f32 %v422, %v496
        %v506 = vmul.f32 %v423, %v496
        %v507 = vmul.f32 %v425, %v496
        %v508 = vmul.f32 %v426, %v496
        %v509 = vmul.f32 %v428, %v496
        %v510 = vmul.f32 %v429, %v496
        %v511 = vmul.f32 %v431, %v496
        %v512 = vmul.f32 %v432, %v496
        %v513 = vadd.f32 %v477, %v497
        %v514 = vadd.f32 %v478, %v498
        %v515 = vadd.f32 %v479, %v499
        %v516 = vadd.f32 %v480, %v500
        %v517 = vadd.f32 %v481, %v501
        %v518 = vadd.f32 %v482, %v502
        %v519 = vadd.f32 %v483, %v503
        %v520 = vadd.f32 %v484, %v504
        %v521 = vadd.f32 %v485, %v505
        %v522 = vadd.f32 %v486, %v506
        %v523 = vadd.f32 %v487, %v507
        %v524 = vadd.f32 %v488, %v508
        %v525 = vadd.f32 %v489, %v509
        %v526 = vadd.f32 %v490, %v510
        %v527 = vadd.f32 %v491, %v511
        %v528 = vadd.f32 %v492, %v512
        %v529 = vlaneseq
        %v530 = vshrl.u32 %v529, 7
        %v531 = vsub.s32 1, %v530
        %v532 = vrot.slane %v434, %v531
        %v533 = vmul.f32 %v404, %v532
        %v534 = vmul.f32 %v405, %v532
        %v535 = vmul.f32 %v406, %v532
        %v536 = vmul.f32 %v407, %v532
        %v537 = vmul.f32 %v408, %v532
        %v538 = vmul.f32 %v409, %v532
        %v539 = vmul.f32 %v410, %v532
        %v540 = vmul.f32 %v411, %v532
        %v541 = vmul.f32 %v412, %v532
        %v542 = vmul.f32 %v413, %v532
        %v543 = vmul.f32 %v414, %v532
        %v544 = vmul.f32 %v415, %v532
        %v545 = vmul.f32 %v416, %v532
        %v546 = vmul.f32 %v417, %v532
        %v547 = vmul.f32 %v418, %v532
        %v548 = vmul.f32 %v419, %v532
        %v549 = vmul.f32 %v420, %v532
        %v550 = vmul.f32 %v421, %v532
        %v551 = vmul.f32 %v422, %v532
        %v552 = vmul.f32 %v423, %v532
        %v553 = vmul.f32 %v424, %v532
        %v554 = vmul.f32 %v425, %v532
        %v555 = vmul.f32 %v426, %v532
        %v556 = vmul.f32 %v427, %v532
        %vm581 = vcmask 1046528
        %v582 = vrot.slane %v533, 1
        %v583 = vrot.slane %v534, 1
        %v584 = vsel %vm581, %v582, %v583
        %v585 = vrot.slane %v535, 1
        %v586 = vsel %vm581, %v583, %v585
        %v587 = vrot.slane %v536, 1
        %v588 = vrot.slane %v537, 1
        %v589 = vsel %vm581, %v587, %v588
        %v590 = vrot.slane %v538, 1
        %v591 = vsel %vm581, %v588, %v590
        %v592 = vrot.slane %v539, 1
        %v593 = vrot.slane %v540, 1
        %v594 = vsel %vm581, %v592, %v593
        %v595 = vrot.slane %v541, 1
        %v596 = vsel %vm581, %v593, %v595
        %v597 = vrot.slane %v542, 1
        %v598 = vrot.slane %v543, 1
        %v599 = vsel %vm581, %v597, %v598
        %v600 = vrot.slane %v544, 1
        %v601 = vsel %vm581, %v598, %v600
        %v602 = vrot.slane %v545, 1
        %v603 = vrot.slane %v546, 1
        %v604 = vsel %vm581, %v602, %v603
        %v605 = vrot.slane %v547, 1
        %v606 = vsel %vm581, %v603, %v605
        %v607 = vrot.slane %v548, 1
        %v608 = vrot.slane %v549, 1
        %v609 = vsel %vm581, %v607, %v608
        %v610 = vrot.slane %v550, 1
        %v611 = vsel %vm581, %v608, %v610
        %v612 = vrot.slane %v551, 1
        %v613 = vrot.slane %v552, 1
        %v614 = vsel %vm581, %v612, %v613
        %v615 = vrot.slane %v553, 1
        %v616 = vsel %vm581, %v613, %v615
        %v617 = vrot.slane %v554, 1
        %v618 = vrot.slane %v555, 1
        %v619 = vsel %vm581, %v617, %v618
        %v620 = vrot.slane %v556, 1
        %v621 = vsel %vm581, %v618, %v620
        %v638 = vadd.f32 %v513, %v584
        %v639 = vadd.f32 %v514, %v586
        %v640 = vadd.f32 %v515, %v589
        %v641 = vadd.f32 %v516, %v591
        %v642 = vadd.f32 %v517, %v594
        %v643 = vadd.f32 %v518, %v596
        %v644 = vadd.f32 %v519, %v599
        %v645 = vadd.f32 %v520, %v601
        %v646 = vadd.f32 %v521, %v604
        %v647 = vadd.f32 %v522, %v606
        %v648 = vadd.f32 %v523, %v609
        %v649 = vadd.f32 %v524, %v611
        %v650 = vadd.f32 %v525, %v614
        %v651 = vadd.f32 %v526, %v616
        %v652 = vadd.f32 %v527, %v619
        %v653 = vadd.f32 %v528, %v621
        %v654 = vlaneseq
        %v655 = vshrl.u32 %v654, 7
        %v656 = vsub.s32 1, %v655
        %v657 = vrot.slane %v435, %v656
        %v658 = vmul.f32 %v407, %v657
        %v659 = vmul.f32 %v408, %v657
        %v660 = vmul.f32 %v409, %v657
        %v661 = vmul.f32 %v410, %v657
        %v662 = vmul.f32 %v411, %v657
        %v663 = vmul.f32 %v412, %v657
        %v664 = vmul.f32 %v413, %v657
        %v665 = vmul.f32 %v414, %v657
        %v666 = vmul.f32 %v415, %v657
        %v667 = vmul.f32 %v416, %v657
        %v668 = vmul.f32 %v417, %v657
        %v669 = vmul.f32 %v418, %v657
        %v670 = vmul.f32 %v419, %v657
        %v671 = vmul.f32 %v420, %v657
        %v672 = vmul.f32 %v421, %v657
        %v673 = vmul.f32 %v422, %v657
        %v674 = vmul.f32 %v423, %v657
        %v675 = vmul.f32 %v424, %v657
        %v676 = vmul.f32 %v425, %v657
        %v677 = vmul.f32 %v426, %v657
        %v678 = vmul.f32 %v427, %v657
        %v679 = vmul.f32 %v428, %v657
        %v680 = vmul.f32 %v429, %v657
        %v681 = vmul.f32 %v430, %v657
        %v706 = vrot.slane %v658, 1
        %v707 = vrot.slane %v659, 1
        %v708 = vsel %vm581, %v706, %v707
        %v709 = vrot.slane %v660, 1
        %v710 = vsel %vm581, %v707, %v709
        %v711 = vrot.slane %v661, 1
        %v712 = vrot.slane %v662, 1
        %v713 = vsel %vm581, %v711, %v712
        %v714 = vrot.slane %v663, 1
        %v715 = vsel %vm581, %v712, %v714
        %v716 = vrot.slane %v664, 1
        %v717 = vrot.slane %v665, 1
        %v718 = vsel %vm581, %v716, %v717
        %v719 = vrot.slane %v666, 1
        %v720 = vsel %vm581, %v717, %v719
        %v721 = vrot.slane %v667, 1
        %v722 = vrot.slane %v668, 1
        %v723 = vsel %vm581, %v721, %v722
        %v724 = vrot.slane %v669, 1
        %v725 = vsel %vm581, %v722, %v724
        %v726 = vrot.slane %v670, 1
        %v727 = vrot.slane %v671, 1
        %v728 = vsel %vm581, %v726, %v727
        %v729 = vrot.slane %v672, 1
        %v730 = vsel %vm581, %v727, %v729
        %v731 = vrot.slane %v673, 1
        %v732 = vrot.slane %v674, 1
        %v733 = vsel %vm581, %v731, %v732
        %v734 = vrot.slane %v675, 1
        %v735 = vsel %vm581, %v732, %v734
        %v736 = vrot.slane %v676, 1
        %v737 = vrot.slane %v677, 1
        %v738 = vsel %vm581, %v736, %v737
        %v739 = vrot.slane %v678, 1
        %v740 = vsel %vm581, %v737, %v739
        %v741 = vrot.slane %v679, 1
        %v742 = vrot.slane %v680, 1
        %v743 = vsel %vm581, %v741, %v742
        %v744 = vrot.slane %v681, 1
        %v745 = vsel %vm581, %v742, %v744
        %v762 = vadd.f32 %v638, %v708
        %v763 = vadd.f32 %v639, %v710
        %v764 = vadd.f32 %v640, %v713
        %v765 = vadd.f32 %v641, %v715
        %v766 = vadd.f32 %v642, %v718
        %v767 = vadd.f32 %v643, %v720
        %v768 = vadd.f32 %v644, %v723
        %v769 = vadd.f32 %v645, %v725
        %v770 = vadd.f32 %v646, %v728
        %v771 = vadd.f32 %v647, %v730
        %v772 = vadd.f32 %v648, %v733
        %v773 = vadd.f32 %v649, %v735
        %v774 = vadd.f32 %v650, %v738
        %v775 = vadd.f32 %v651, %v740
        %v776 = vadd.f32 %v652, %v743
        %v777 = vadd.f32 %v653, %v745
        %v778 = vlaneseq
        %v779 = vshrl.u32 %v778, 7
        %v780 = vsub.s32 1, %v779
        %v781 = vrot.slane %v436, %v780
        %v782 = vmul.f32 %v410, %v781
        %v783 = vmul.f32 %v411, %v781
        %v784 = vmul.f32 %v412, %v781
        %v785 = vmul.f32 %v413, %v781
        %v786 = vmul.f32 %v414, %v781
        %v787 = vmul.f32 %v415, %v781
        %v788 = vmul.f32 %v416, %v781
        %v789 = vmul.f32 %v417, %v781
        %v790 = vmul.f32 %v418, %v781
        %v791 = vmul.f32 %v419, %v781
        %v792 = vmul.f32 %v420, %v781
        %v793 = vmul.f32 %v421, %v781
        %v794 = vmul.f32 %v422, %v781
        %v795 = vmul.f32 %v423, %v781
        %v796 = vmul.f32 %v424, %v781
        %v797 = vmul.f32 %v425, %v781
        %v798 = vmul.f32 %v426, %v781
        %v799 = vmul.f32 %v427, %v781
        %v800 = vmul.f32 %v428, %v781
        %v801 = vmul.f32 %v429, %v781
        %v802 = vmul.f32 %v430, %v781
        %v803 = vmul.f32 %v431, %v781
        %v804 = vmul.f32 %v432, %v781
        %v805 = vmul.f32 %v433, %v781
        %v830 = vrot.slane %v782, 1
        %v831 = vrot.slane %v783, 1
        %v832 = vsel %vm581, %v830, %v831
        %v833 = vrot.slane %v784, 1
        %v834 = vsel %vm581, %v831, %v833
        %v835 = vrot.slane %v785, 1
        %v836 = vrot.slane %v786, 1
        %v837 = vsel %vm581, %v835, %v836
        %v838 = vrot.slane %v787, 1
        %v839 = vsel %vm581, %v836, %v838
        %v840 = vrot.slane %v788, 1
        %v841 = vrot.slane %v789, 1
        %v842 = vsel %vm581, %v840, %v841
        %v843 = vrot.slane %v790, 1
        %v844 = vsel %vm581, %v841, %v843
        %v845 = vrot.slane %v791, 1
        %v846 = vrot.slane %v792, 1
        %v847 = vsel %vm581, %v845, %v846
        %v848 = vrot.slane %v793, 1
        %v849 = vsel %vm581, %v846, %v848
        %v850 = vrot.slane %v794, 1
        %v851 = vrot.slane %v795, 1
        %v852 = vsel %vm581, %v850, %v851
        %v853 = vrot.slane %v796, 1
        %v854 = vsel %vm581, %v851, %v853
        %v855 = vrot.slane %v797, 1
        %v856 = vrot.slane %v798, 1
        %v857 = vsel %vm581, %v855, %v856
        %v858 = vrot.slane %v799, 1
        %v859 = vsel %vm581, %v856, %v858
        %v860 = vrot.slane %v800, 1
        %v861 = vrot.slane %v801, 1
        %v862 = vsel %vm581, %v860, %v861
        %v863 = vrot.slane %v802, 1
        %v864 = vsel %vm581, %v861, %v863
        %v865 = vrot.slane %v803, 1
        %v866 = vrot.slane %v804, 1
        %v867 = vsel %vm581, %v865, %v866
        %v868 = vrot.slane %v805, 1
        %v869 = vsel %vm581, %v866, %v868
        %v886 = vadd.f32 %v762, %v832
        %v887 = vadd.f32 %v763, %v834
        %v888 = vadd.f32 %v764, %v837
        %v889 = vadd.f32 %v765, %v839
        %v890 = vadd.f32 %v766, %v842
        %v891 = vadd.f32 %v767, %v844
        %v892 = vadd.f32 %v768, %v847
        %v893 = vadd.f32 %v769, %v849
        %v894 = vadd.f32 %v770, %v852
        %v895 = vadd.f32 %v771, %v854
        %v896 = vadd.f32 %v772, %v857
        %v897 = vadd.f32 %v773, %v859
        %v898 = vadd.f32 %v774, %v862
        %v899 = vadd.f32 %v775, %v864
        %v900 = vadd.f32 %v776, %v867
        %v901 = vadd.f32 %v777, %v869
        %v902 = vlaneseq
        %v903 = vshrl.u32 %v902, 7
        %v904 = vsub.s32 2, %v903
        %v905 = vrot.slane %v434, %v904
        %v906 = vmul.f32 %v404, %v905
        %v907 = vmul.f32 %v405, %v905
        %v908 = vmul.f32 %v406, %v905
        %v909 = vmul.f32 %v407, %v905
        %v910 = vmul.f32 %v408, %v905
        %v911 = vmul.f32 %v409, %v905
        %v912 = vmul.f32 %v410, %v905
        %v913 = vmul.f32 %v411, %v905
        %v914 = vmul.f32 %v412, %v905
        %v915 = vmul.f32 %v413, %v905
        %v916 = vmul.f32 %v414, %v905
        %v917 = vmul.f32 %v415, %v905
        %v918 = vmul.f32 %v416, %v905
        %v919 = vmul.f32 %v417, %v905
        %v920 = vmul.f32 %v418, %v905
        %v921 = vmul.f32 %v419, %v905
        %v922 = vmul.f32 %v420, %v905
        %v923 = vmul.f32 %v421, %v905
        %v924 = vmul.f32 %v422, %v905
        %v925 = vmul.f32 %v423, %v905
        %v926 = vmul.f32 %v424, %v905
        %v927 = vmul.f32 %v425, %v905
        %v928 = vmul.f32 %v426, %v905
        %v929 = vmul.f32 %v427, %v905
        %vm954 = vcmask 1045504
        %v955 = vrot.slane %v906, 2
        %v956 = vrot.slane %v907, 2
        %v957 = vsel %vm954, %v955, %v956
        %v958 = vrot.slane %v908, 2
        %v959 = vsel %vm954, %v956, %v958
        %v960 = vrot.slane %v909, 2
        %v961 = vrot.slane %v910, 2
        %v962 = vsel %vm954, %v960, %v961
        %v963 = vrot.slane %v911, 2
        %v964 = vsel %vm954, %v961, %v963
        %v965 = vrot.slane %v912, 2
        %v966 = vrot.slane %v913, 2
        %v967 = vsel %vm954, %v965, %v966
        %v968 = vrot.slane %v914, 2
        %v969 = vsel %vm954, %v966, %v968
        %v970 = vrot.slane %v915, 2
        %v971 = vrot.slane %v916, 2
        %v972 = vsel %vm954, %v970, %v971
        %v973 = vrot.slane %v917, 2
        %v974 = vsel %vm954, %v971, %v973
        %v975 = vrot.slane %v918, 2
        %v976 = vrot.slane %v919, 2
        %v977 = vsel %vm954, %v975, %v976
        %v978 = vrot.slane %v920, 2
        %v979 = vsel %vm954, %v976, %v978
        %v980 = vrot.slane %v921, 2
        %v981 = vrot.slane %v922, 2
        %v982 = vsel %vm954, %v980, %v981
        %v983 = vrot.slane %v923, 2
        %v984 = vsel %vm954, %v981, %v983
        %v985 = vrot.slane %v924, 2
        %v986 = vrot.slane %v925, 2
        %v987 = vsel %vm954, %v985, %v986
        %v988 = vrot.slane %v926, 2
        %v989 = vsel %vm954, %v986, %v988
        %v990 = vrot.slane %v927, 2
        %v991 = vrot.slane %v928, 2
        %v992 = vsel %vm954, %v990, %v991
        %v993 = vrot.slane %v929, 2
        %v994 = vsel %vm954, %v991, %v993
        %v1011 = vadd.f32 %v886, %v957
        %v1012 = vadd.f32 %v887, %v959
        %v1013 = vadd.f32 %v888, %v962
        %v1014 = vadd.f32 %v889, %v964
        %v1015 = vadd.f32 %v890, %v967
        %v1016 = vadd.f32 %v891, %v969
        %v1017 = vadd.f32 %v892, %v972
        %v1018 = vadd.f32 %v893, %v974
        %v1019 = vadd.f32 %v894, %v977
        %v1020 = vadd.f32 %v895, %v979
        %v1021 = vadd.f32 %v896, %v982
        %v1022 = vadd.f32 %v897, %v984
        %v1023 = vadd.f32 %v898, %v987
        %v1024 = vadd.f32 %v899, %v989
        %v1025 = vadd.f32 %v900, %v992
        %v1026 = vadd.f32 %v901, %v994
        %v1027 = vlaneseq
        %v1028 = vshrl.u32 %v1027, 7
        %v1029 = vsub.s32 2, %v1028
        %v1030 = vrot.slane %v435, %v1029
        %v1031 = vmul.f32 %v407, %v1030
        %v1032 = vmul.f32 %v408, %v1030
        %v1033 = vmul.f32 %v409, %v1030
        %v1034 = vmul.f32 %v410, %v1030
        %v1035 = vmul.f32 %v411, %v1030
        %v1036 = vmul.f32 %v412, %v1030
        %v1037 = vmul.f32 %v413, %v1030
        %v1038 = vmul.f32 %v414, %v1030
        %v1039 = vmul.f32 %v415, %v1030
        %v1040 = vmul.f32 %v416, %v1030
        %v1041 = vmul.f32 %v417, %v1030
        %v1042 = vmul.f32 %v418, %v1030
        %v1043 = vmul.f32 %v419, %v1030
        %v1044 = vmul.f32 %v420, %v1030
        %v1045 = vmul.f32 %v421, %v1030
        %v1046 = vmul.f32 %v422, %v1030
        %v1047 = vmul.f32 %v423, %v1030
        %v1048 = vmul.f32 %v424, %v1030
        %v1049 = vmul.f32 %v425, %v1030
        %v1050 = vmul.f32 %v426, %v1030
        %v1051 = vmul.f32 %v427, %v1030
        %v1052 = vmul.f32 %v428, %v1030
        %v1053 = vmul.f32 %v429, %v1030
        %v1054 = vmul.f32 %v430, %v1030
        %v1079 = vrot.slane %v1031, 2
        %v1080 = vrot.slane %v1032, 2
        %v1081 = vsel %vm954, %v1079, %v1080
        %v1082 = vrot.slane %v1033, 2
        %v1083 = vsel %vm954, %v1080, %v1082
        %v1084 = vrot.slane %v1034, 2
        %v1085 = vrot.slane %v1035, 2
        %v1086 = vsel %vm954, %v1084, %v1085
        %v1087 = vrot.slane %v1036, 2
        %v1088 = vsel %vm954, %v1085, %v1087
        %v1089 = vrot.slane %v1037, 2
        %v1090 = vrot.slane %v1038, 2
        %v1091 = vsel %vm954, %v1089, %v1090
        %v1092 = vrot.slane %v1039, 2
        %v1093 = vsel %vm954, %v1090, %v1092
        %v1094 = vrot.slane %v1040, 2
        %v1095 = vrot.slane %v1041, 2
        %v1096 = vsel %vm954, %v1094, %v1095
        %v1097 = vrot.slane %v1042, 2
        %v1098 = vsel %vm954, %v1095, %v1097
        %v1099 = vrot.slane %v1043, 2
        %v1100 = vrot.slane %v1044, 2
        %v1101 = vsel %vm954, %v1099, %v1100
        %v1102 = vrot.slane %v1045, 2
        %v1103 = vsel %vm954, %v1100, %v1102
        %v1104 = vrot.slane %v1046, 2
        %v1105 = vrot.slane %v1047, 2
        %v1106 = vsel %vm954, %v1104, %v1105
        %v1107 = vrot.slane %v1048, 2
        %v1108 = vsel %vm954, %v1105, %v1107
        %v1109 = vrot.slane %v1049, 2
        %v1110 = vrot.slane %v1050, 2
        %v1111 = vsel %vm954, %v1109, %v1110
        %v1112 = vrot.slane %v1051, 2
        %v1113 = vsel %vm954, %v1110, %v1112
        %v1114 = vrot.slane %v1052, 2
        %v1115 = vrot.slane %v1053, 2
        %v1116 = vsel %vm954, %v1114, %v1115
        %v1117 = vrot.slane %v1054, 2
        %v1118 = vsel %vm954, %v1115, %v1117
        %v1135 = vadd.f32 %v1011, %v1081
        %v1136 = vadd.f32 %v1012, %v1083
        %v1137 = vadd.f32 %v1013, %v1086
        %v1138 = vadd.f32 %v1014, %v1088
        %v1139 = vadd.f32 %v1015, %v1091
        %v1140 = vadd.f32 %v1016, %v1093
        %v1141 = vadd.f32 %v1017, %v1096
        %v1142 = vadd.f32 %v1018, %v1098
        %v1143 = vadd.f32 %v1019, %v1101
        %v1144 = vadd.f32 %v1020, %v1103
        %v1145 = vadd.f32 %v1021, %v1106
        %v1146 = vadd.f32 %v1022, %v1108
        %v1147 = vadd.f32 %v1023, %v1111
        %v1148 = vadd.f32 %v1024, %v1113
        %v1149 = vadd.f32 %v1025, %v1116
        %v1150 = vadd.f32 %v1026, %v1118
        %v1151 = vlaneseq
        %v1152 = vshrl.u32 %v1151, 7
        %v1153 = vsub.s32 2, %v1152
        %v1154 = vrot.slane %v436, %v1153
        %v1155 = vmul.f32 %v410, %v1154
        %v1156 = vmul.f32 %v411, %v1154
        %v1157 = vmul.f32 %v412, %v1154
        %v1158 = vmul.f32 %v413, %v1154
        %v1159 = vmul.f32 %v414, %v1154
        %v1160 = vmul.f32 %v415, %v1154
        %v1161 = vmul.f32 %v416, %v1154
        %v1162 = vmul.f32 %v417, %v1154
        %v1163 = vmul.f32 %v418, %v1154
        %v1164 = vmul.f32 %v419, %v1154
        %v1165 = vmul.f32 %v420, %v1154
        %v1166 = vmul.f32 %v421, %v1154
        %v1167 = vmul.f32 %v422, %v1154
        %v1168 = vmul.f32 %v423, %v1154
        %v1169 = vmul.f32 %v424, %v1154
        %v1170 = vmul.f32 %v425, %v1154
        %v1171 = vmul.f32 %v426, %v1154
        %v1172 = vmul.f32 %v427, %v1154
        %v1173 = vmul.f32 %v428, %v1154
        %v1174 = vmul.f32 %v429, %v1154
        %v1175 = vmul.f32 %v430, %v1154
        %v1176 = vmul.f32 %v431, %v1154
        %v1177 = vmul.f32 %v432, %v1154
        %v1178 = vmul.f32 %v433, %v1154
        %v1203 = vrot.slane %v1155, 2
        %v1204 = vrot.slane %v1156, 2
        %v1205 = vsel %vm954, %v1203, %v1204
        %v1206 = vrot.slane %v1157, 2
        %v1207 = vsel %vm954, %v1204, %v1206
        %v1208 = vrot.slane %v1158, 2
        %v1209 = vrot.slane %v1159, 2
        %v1210 = vsel %vm954, %v1208, %v1209
        %v1211 = vrot.slane %v1160, 2
        %v1212 = vsel %vm954, %v1209, %v1211
        %v1213 = vrot.slane %v1161, 2
        %v1214 = vrot.slane %v1162, 2
        %v1215 = vsel %vm954, %v1213, %v1214
        %v1216 = vrot.slane %v1163, 2
        %v1217 = vsel %vm954, %v1214, %v1216
        %v1218 = vrot.slane %v1164, 2
        %v1219 = vrot.slane %v1165, 2
        %v1220 = vsel %vm954, %v1218, %v1219
        %v1221 = vrot.slane %v1166, 2
        %v1222 = vsel %vm954, %v1219, %v1221
        %v1223 = vrot.slane %v1167, 2
        %v1224 = vrot.slane %v1168, 2
        %v1225 = vsel %vm954, %v1223, %v1224
        %v1226 = vrot.slane %v1169, 2
        %v1227 = vsel %vm954, %v1224, %v1226
        %v1228 = vrot.slane %v1170, 2
        %v1229 = vrot.slane %v1171, 2
        %v1230 = vsel %vm954, %v1228, %v1229
        %v1231 = vrot.slane %v1172, 2
        %v1232 = vsel %vm954, %v1229, %v1231
        %v1233 = vrot.slane %v1173, 2
        %v1234 = vrot.slane %v1174, 2
        %v1235 = vsel %vm954, %v1233, %v1234
        %v1236 = vrot.slane %v1175, 2
        %v1237 = vsel %vm954, %v1234, %v1236
        %v1238 = vrot.slane %v1176, 2
        %v1239 = vrot.slane %v1177, 2
        %v1240 = vsel %vm954, %v1238, %v1239
        %v1241 = vrot.slane %v1178, 2
        %v1242 = vsel %vm954, %v1239, %v1241
        %v1259 = vadd.f32 %v1135, %v1205
        %v1260 = vadd.f32 %v1136, %v1207
        %v1261 = vadd.f32 %v1137, %v1210
        %v1262 = vadd.f32 %v1138, %v1212
        %v1263 = vadd.f32 %v1139, %v1215
        %v1264 = vadd.f32 %v1140, %v1217
        %v1265 = vadd.f32 %v1141, %v1220
        %v1266 = vadd.f32 %v1142, %v1222
        %v1267 = vadd.f32 %v1143, %v1225
        %v1268 = vadd.f32 %v1144, %v1227
        %v1269 = vadd.f32 %v1145, %v1230
        %v1270 = vadd.f32 %v1146, %v1232
        %v1271 = vadd.f32 %v1147, %v1235
        %v1272 = vadd.f32 %v1148, %v1237
        %v1273 = vadd.f32 %v1149, %v1240
        %v1274 = vadd.f32 %v1150, %v1242
        %v1275 = vld [vmem:[%s4] sm:$0xff]
        %v1276 = vld [vmem:[%s5] sm:$0xff]
        %1278 = vset.pattern.permute.xlu0 0
        %1279 = vperm.xlu0 %1278, %v1276
        %v1280 = vpop.permute.xlu0 %1279
        %vm1282 = vcmask 31744
        %v1284 = vsel %vm1282, %v1275, 0
        %v1287 = vsel %vm1282, %v1259, 0
        %v1290 = vsel %vm1282, %v1260, 0
        %v1293 = vsel %vm1282, %v1261, 0
        %v1296 = vsel %vm1282, %v1262, 0
        %v1299 = vsel %vm1282, %v1263, 0
        %v1302 = vsel %vm1282, %v1264, 0
        %v1305 = vsel %vm1282, %v1265, 0
        %v1308 = vsel %vm1282, %v1266, 0
        %v1311 = vsel %vm1282, %v1267, 0
        %v1314 = vsel %vm1282, %v1268, 0
        %v1317 = vsel %vm1282, %v1269, 0
        %v1320 = vsel %vm1282, %v1270, 0
        %v1323 = vsel %vm1282, %v1271, 0
        %v1326 = vsel %vm1282, %v1272, 0
        %v1329 = vsel %vm1282, %v1273, 0
        %v1332 = vsel %vm1282, %v1274, 0
        %1334 = vmatprep.subr.mxu0 0.0
        %1335 = vmatpush1.xpose.msra.mxu0 %v1287
        %1336 = vmatprep.subr.mxu0 0.0
        %1337 = vmatpush1.xpose.msra.mxu0 %v1290
        %1338 = vmatprep.subr.mxu0 0.0
        %1339 = vmatpush1.xpose.msra.mxu0 %v1293
        %1340 = vmatprep.subr.mxu0 0.0
        %1341 = vmatpush1.xpose.msra.mxu0 %v1296
        %1342 = vmatprep.subr.mxu0 0.0
        %1343 = vmatpush1.xpose.msra.mxu0 %v1299
        %1344 = vmatprep.subr.mxu0 0.0
        %1345 = vmatpush1.xpose.msra.mxu0 %v1302
        %1346 = vmatprep.subr.mxu0 0.0
        %1347 = vmatpush1.xpose.msra.mxu0 %v1305
        %1348 = vmatprep.subr.mxu0 0.0
        %1349 = vmatpush1.xpose.msra.mxu0 %v1308
        %1350 = vmatprep.subr.mxu0 0.0
        %1351 = vmatpush1.xpose.msra.mxu0 %v1311
        %1352 = vmatprep.subr.mxu0 0.0
        %1353 = vmatpush1.xpose.msra.mxu0 %v1314
        %1354 = vmatprep.subr.mxu0 0.0
        %1355 = vmatpush1.xpose.msra.mxu0 %v1317
        %1356 = vmatprep.subr.mxu0 0.0
        %1357 = vmatpush1.xpose.msra.mxu0 %v1320
        %1358 = vmatprep.subr.mxu0 0.0
        %1359 = vmatpush1.xpose.msra.mxu0 %v1323
        %1360 = vmatprep.subr.mxu0 0.0
        %1361 = vmatpush1.xpose.msra.mxu0 %v1326
        %1362 = vmatprep.subr.mxu0 0.0
        %1363 = vmatpush1.xpose.msra.mxu0 %v1329
        %1364 = vmatprep.subr.mxu0 0.0
        %1365 = vmatpush1.xpose.msra.mxu0 %v1332
        %1366 = vmatprep.subr.mxu0 0.0
        %1367 = vmatpush1.xpose.msra.mxu0 0.0
        %1368 = vmatprep.subr.mxu0 0.0
        %1369 = vmatpush1.xpose.msra.mxu0 0.0
        %1370 = vmatprep.subr.mxu0 0.0
        %1371 = vmatpush1.xpose.msra.mxu0 0.0
        %1372 = vmatprep.subr.mxu0 0.0
        %1373 = vmatpush1.xpose.msra.mxu0 0.0
        %1374 = vmatprep.subr.mxu0 0.0
        %1375 = vmatpush1.xpose.msra.mxu0 0.0
        %1376 = vmatprep.subr.mxu0 0.0
        %1377 = vmatpush1.xpose.msra.mxu0 0.0
        %1378 = vmatprep.subr.mxu0 0.0
        %1379 = vmatpush1.xpose.msra.mxu0 0.0
        %1380 = vmatprep.subr.mxu0 0.0
        %1381 = vmatpush1.xpose.msra.mxu0 0.0
        %1382 = vmatprep.subr.mxu0 0.0
        %1383 = vmatpush1.xpose.msra.mxu0 0.0
        %1384 = vmatprep.subr.mxu0 0.0
        %1385 = vmatpush1.xpose.msra.mxu0 0.0
        %1386 = vmatprep.subr.mxu0 0.0
        %1387 = vmatpush1.xpose.msra.mxu0 0.0
        %1388 = vmatprep.subr.mxu0 0.0
        %1389 = vmatpush1.xpose.msra.mxu0 0.0
        %1390 = vmatprep.subr.mxu0 0.0
        %1391 = vmatpush1.xpose.msra.mxu0 0.0
        %1392 = vmatprep.subr.mxu0 0.0
        %1393 = vmatpush1.xpose.msra.mxu0 0.0
        %1394 = vmatprep.subr.mxu0 0.0
        %1395 = vmatpush1.xpose.msra.mxu0 0.0
        %1396 = vmatprep.subr.mxu0 0.0
        %1397 = vmatpush1.xpose.msra.mxu0 0.0
        %1398 = vmatprep.mubr.f32.mxu0 0.0
        %1399 = vmatmul.mubr.f32.gmra.mrb[0].mxu0 %v1284
        %v1400 = vpop.f32.mrb[0].mxu0
        %v1401 = vadd.f32 %v1280, %v1400
        %v1402 = vpop.f32.mrb[0].mxu0
        %1403 = vdwg.mxu0
        %1404 = vst [vmem:[%s356] sm:$0xff] %v1401
        %s1405 = sand.u32 %s197, 1
        %s1406 = scalar_lea.sflag [#allocation3], %s1405
        %s1407 = sand.u32 %s197, 1
        %s1408 = smul.addr %s1407, 8
        %s1409 = scalar_lea.vmem [#allocation2], %s1408
        // Predicated region
        $region45: #{tpu_custom_call.1} parent=43 // pred_check
          %p1410 = pneg %p207
        $region46: #{tpu_custom_call.1} parent=43 // pred_check_branch
          %1412 = sbr.rel (%p1410) target = $region48
        $region47: #{tpu_custom_call.1} parent=43 // pred_region
          %s1414 = ssub.s32 128, 128
          %1415 = vsyncadd %s1406, %s1414
          %s1416 = smul.addr %s24, 2
          %s1417 = sadd.s32 %s25, %s1416
          %s1418 = smul.addr %s1417, 128
          %s1419 = scalar_lea.hbm %s6, %s1418
          %s1421 = sshll.u32 %s1409, 4
          %s1422 = int_to_ptr.vmem [resolvable:$true] %s1421
          %1424 = dma.vmem_to_hbm [thread:$0]  %s1422, 128, %s1419, %s1406
        $region48: #{tpu_custom_call.1} parent=43 // pred_fallthru
          _
      $region44: #{tpu_custom_call.1} parent=5 // pred_fallthru
        _
      %p1425 = scmp.le.s32.totalorder 2, %s15
      // Predicated region
      $region49: #{tpu_custom_call.1} parent=5 // pred_check
        %p1426 = pneg %p1425
      $region50: #{tpu_custom_call.1} parent=5 // pred_check_branch
        %1428 = sbr.rel (%p1426) target = $region52
      $region51: #{tpu_custom_call.1} parent=5 // pred_region
        %s1429 = ssub.s32 %s15, 2
        // Predicated region
        $region53: #{tpu_custom_call.1} parent=51 // pred_check
          %p1430 = pneg %p213
        $region54: #{tpu_custom_call.1} parent=51 // pred_check_branch
          %1432 = sbr.rel (%p1430) target = $region56
        $region55: #{tpu_custom_call.1} parent=51 // pred_region
          %s1433 = sand.u32 %s198, 1
          %s1434 = scalar_lea.sflag [#allocation3], %s1433
          %s1435 = sand.u32 %s198, 1
          %s1436 = smul.addr %s1435, 8
          %s1437 = scalar_lea.vmem [#allocation2], %s1436
          %1438 = dma.done %s1434, 128
        $region56: #{tpu_custom_call.1} parent=51 // pred_fallthru
          _
      $region52: #{tpu_custom_call.1} parent=5 // pred_fallthru
        _
    $region6: #{tpu_custom_call.1} parent=1 // loop_footer
      %s19 = sadd.s32 1, %s15
    $region7: #{tpu_custom_call.1} parent=1 // loop_footer_branch
      %14 = sbr.rel target = $region3
    $region8: #{tpu_custom_call.1} parent=1 // loop_exit
      _
    %1439 = vsyncpa [#allocation3], 1
    %s1440 = scalar_lea.sflag [#allocation3], 1
    %1441 = vsyncpa %s1440, 1

</llo_original>
